<compile_context>
chip_gen: v7x
topology: tpu7x:2x2x1
jax: 0.10.0
libtpu: 0.0.40
codegen_flags: <defaults>
</compile_context>

<pallas_src>
import functools

import jax
import jax.numpy as jnp
from jax.experimental import pallas as pl
from jax.experimental.pallas import tpu as pltpu


def _seqwise_linear_kernel(x_ref, w_ref, b_ref, o_ref):
    # x_ref: (tm, H) compute dtype, w_ref: (H, tn) compute dtype,
    # b_ref: (1, tn) f32, o_ref: (tm, tn) output dtype.  f32 accumulation.
    acc = jnp.dot(x_ref[...], w_ref[...], preferred_element_type=jnp.float32)
    o_ref[...] = (acc + b_ref[...].astype(jnp.float32)).astype(o_ref.dtype)


def _round_up(v, m):
    return ((v + m - 1) // m) * m


@functools.lru_cache(maxsize=1)
def _vmem_budget_bytes():
    cap = 64 * 1024 * 1024  # conservative fallback (v7x per-TC capacity)
    try:
        info = pltpu.get_tpu_info()
        cap = int(getattr(info, "vmem_capacity_bytes", cap))
    except Exception:
        pass
    # ~20% headroom for compiler scratch / semaphores / pipeline bookkeeping:
    # ~51 MiB on v7x (64 MiB/TC), ~102 MiB on v5e/v6e (128 MiB).
    return int(cap * 0.8)


def _choose_tiles(M, H, HO, bpe_in, bpe_out, budget, sub, tm_pref):
    """Pick (tm, tn).  tn=None means the whole weight stays VMEM-resident."""

    def footprint(tm, tn):
        # Double-buffered x / w blocks + double-buffered output + bias blocks.
        return 2 * ((tm * H + H * tn) * bpe_in + tm * tn * bpe_out + tn * 4)

    tm_max = min(_round_up(M, sub), _round_up(tm_pref, sub))

    # Case A: full weight resident, 1-D grid over row tiles.
    tm = tm_max
    while tm > max(sub, 256) and footprint(tm, HO) > budget:
        tm = _round_up(max(tm // 2, sub), sub)
    if footprint(tm, HO) <= budget:
        return tm, None

    # Case B: tile the HO axis as well (grid order picked by the caller).
    tn = min(_round_up(HO, 128), 512)
    tm = tm_max
    while footprint(tm, tn) > budget:
        if tn >= tm and tn > 256:
            tn = _round_up(tn // 2, 128)
        elif tm > 256:
            tm = _round_up(max(tm // 2, sub), sub)
        elif tn > 128:
            tn = _round_up(tn // 2, 128)
        elif tm > sub:
            tm = _round_up(max(tm // 2, sub), sub)
        else:
            break
    # TODO(synk): if H is ever so large that a (sub, H) x (H, 128) block pair
    # still exceeds VMEM, add a K ("arbitrary") grid axis + f32 VMEM accumulator.
    return tm, tn


@functools.partial(jax.jit, static_argnames=("tm", "tn", "compute_dtype"))
def sequence_wise_linear(x, weight, bias, *, tm=None, tn=None,
                         compute_dtype=jnp.bfloat16):
    """SequenceWise(Linear(H, H_out)): x (T, N, H) -> (T, N, H_out)."""
    T, N, H = x.shape
    HO = weight.shape[1]
    M = T * N

    out_dtype = x.dtype
    if compute_dtype is None:
        compute_dtype = x.dtype
    compute_dtype = jnp.dtype(compute_dtype)

    # MXU-native inputs (bf16 by default); bias stays f32, accumulation is f32,
    # output keeps the original input dtype.
    x_c = x.reshape(M, H).astype(compute_dtype)   # contiguous collapse: free view
    w_c = weight.astype(compute_dtype)
    b_c = bias.reshape(1, HO).astype(jnp.float32)

    bpe_in = compute_dtype.itemsize
    bpe_out = jnp.dtype(out_dtype).itemsize
    sub = max(8, 32 // bpe_in)                     # 8 (f32) / 16 (bf16) / 32 (8-bit)

    budget = _vmem_budget_bytes()
    tm_pref = tm if tm is not None else (2048 if budget >= 80 * 1024 * 1024 else 1024)
    tm_eff, tn_eff = _choose_tiles(M, H, HO, bpe_in, bpe_out, budget, sub, tm_pref)
    if tn is not None:
        tn_eff = min(_round_up(tn, 128), _round_up(HO, 128))

    num_m = pl.cdiv(M, tm_eff)
    flops = 2 * M * H * HO
    bytes_accessed = (M * H + H * HO) * bpe_in + HO * 4 + M * HO * bpe_out

    if tn_eff is None:
        # Weight-resident: constant block index -> the full weight is DMA'd once.
        grid = (num_m,)
        in_specs = [
            pl.BlockSpec((tm_eff, H), lambda i: (i, 0)),
            pl.BlockSpec((H, HO), lambda i: (0, 0)),
            pl.BlockSpec((1, HO), lambda i: (0, 0)),
        ]
        out_specs = pl.BlockSpec((tm_eff, HO), lambda i: (i, 0))
        dim_sem = ("parallel",)
    else:
        num_n = pl.cdiv(HO, tn_eff)
        if num_m > num_n:
            # Weight-stationary ordering: HO tiles outer, row tiles inner, so the
            # weight is streamed from HBM ~once instead of num_m times.
            grid = (num_n, num_m)
            in_specs = [
                pl.BlockSpec((tm_eff, H), lambda j, i: (i, 0)),
                pl.BlockSpec((H, tn_eff), lambda j, i: (0, j)),
                pl.BlockSpec((1, tn_eff), lambda j, i: (0, j)),
            ]
            out_specs = pl.BlockSpec((tm_eff, tn_eff), lambda j, i: (i, j))
        else:
            grid = (num_m, num_n)
            in_specs = [
                pl.BlockSpec((tm_eff, H), lambda i, j: (i, 0)),
                pl.BlockSpec((H, tn_eff), lambda i, j: (0, j)),
                pl.BlockSpec((1, tn_eff), lambda i, j: (0, j)),
            ]
            out_specs = pl.BlockSpec((tm_eff, tn_eff), lambda i, j: (i, j))
        dim_sem = ("parallel", "parallel")
        # TODO(synk): if profiling shows exposed DMA on the streamed operand,
        # set pipeline_mode=pl.Buffered(3) on its BlockSpec.

    out2 = pl.pallas_call(
        _seqwise_linear_kernel,
        out_shape=jax.ShapeDtypeStruct((M, HO), out_dtype),
        grid_spec=pltpu.PrefetchScalarGridSpec(
            num_scalar_prefetch=0,
            grid=grid,
            in_specs=in_specs,
            out_specs=out_specs,
        ),
        compiler_params=pltpu.CompilerParams(
            dimension_semantics=dim_sem,
            vmem_limit_bytes=budget,
        ),
        cost_estimate=pl.CostEstimate(
            flops=flops, bytes_accessed=bytes_accessed, transcendentals=0),
    )(x_c, w_c, b_c)

    return out2.reshape(T, N, HO)


if __name__ == "__main__":
    # Small shapes implied by the forward: (T, N, H) sequence-major input.
    T, N, H, HO = 8, 2, 32, 32

    key = jax.random.PRNGKey(0)
    kx, kw, kb = jax.random.split(key, 3)

    x = jax.random.normal(kx, (T, N, H), dtype=jnp.float32)
    bound = 1.0 / (H ** 0.5)
    weight = jax.random.uniform(kw, (H, HO), jnp.float32, -bound, bound)
    bias = jax.random.uniform(kb, (HO,), jnp.float32, -bound, bound)

    # Exact f32-compute path first (tight tolerance against plain JAX).
    out = jax.block_until_ready(
        sequence_wise_linear(x, weight, bias, compute_dtype=jnp.float32))
    ref = (x.reshape(T * N, H) @ weight + bias).reshape(T, N, HO)
    assert out.shape == (T, N, HO)
    assert jnp.allclose(out, ref, atol=1e-5, rtol=1e-5)

    # Default bf16-compute path on ragged shapes (M and HO not multiples of the
    # tile / 128) to exercise the masked-edge handling and f32 accumulation.
    T2, N2, H2, HO2 = 37, 7, 96, 200
    x2 = jax.random.normal(kx, (T2, N2, H2), dtype=jnp.float32)
    w2 = jax.random.uniform(kw, (H2, HO2), jnp.float32, -bound, bound)
    b2 = jax.random.uniform(kb, (HO2,), jnp.float32, -bound, bound)
    out_big = jax.block_until_ready(sequence_wise_linear(x2, w2, b2))
    ref_big = (x2.reshape(T2 * N2, H2) @ w2 + b2).reshape(T2, N2, HO2)
    assert out_big.shape == (T2, N2, HO2)
    assert jnp.allclose(out_big, ref_big, atol=5e-2, rtol=5e-2)

    print("KERNEL_OK")
</pallas_src>

<mosaic_0001>
module attributes {stable_mosaic.version = 11 : i64} {
  func.func @_seqwise_linear_kernel(%arg0: i32, %arg1: memref<16x32xf32, #tpu.memory_space<vmem>>, %arg2: memref<32x32xf32, #tpu.memory_space<vmem>>, %arg3: memref<1x32xf32, #tpu.memory_space<vmem>>, %arg4: memref<16x32xf32, #tpu.memory_space<vmem>>) attributes {dimension_semantics = [#tpu.dimension_semantics<parallel>], iteration_bounds = array<i64: 1>, scalar_prefetch = 0 : i64, scratch_operands = 0 : i64, tpu.core_type = #tpu.core_type<tc>, window_params = [{transform_indices = @transform_0, window_bounds = array<i64: 16, 32>}, {pipeline_mode = #tpu.pipeline_mode<synchronous>, transform_indices = @transform_1, window_bounds = array<i64: 32, 32>}, {pipeline_mode = #tpu.pipeline_mode<synchronous>, transform_indices = @transform_2, window_bounds = array<i64: 1, 32>}, {transform_indices = @transform_3, window_bounds = array<i64: 16, 32>}]} {
    %c0 = arith.constant 0 : index
    %c0_0 = arith.constant 0 : index
    %0 = vector.load %arg1[%c0, %c0_0] : memref<16x32xf32, #tpu.memory_space<vmem>>, vector<16x32xf32>
    %c0_1 = arith.constant 0 : index
    %c0_2 = arith.constant 0 : index
    %1 = vector.load %arg2[%c0_1, %c0_2] : memref<32x32xf32, #tpu.memory_space<vmem>>, vector<32x32xf32>
    %cst = arith.constant dense<0.000000e+00> : vector<16x32xf32>
    %2 = tpu.matmul %0, %1, %cst {dimension_numbers = #tpu.dot_dimension_numbers<[1], [0], [0], [1], [0, 0, 1, 1], [], []>} : vector<16x32xf32>, vector<32x32xf32>, vector<16x32xf32> -> vector<16x32xf32>
    %c0_3 = arith.constant 0 : index
    %c0_4 = arith.constant 0 : index
    %3 = vector.load %arg3[%c0_3, %c0_4] : memref<1x32xf32, #tpu.memory_space<vmem>>, vector<1x32xf32>
    %4 = vector.broadcast %3 : vector<1x32xf32> to vector<16x32xf32>
    %5 = arith.addf %2, %4 : vector<16x32xf32>
    %c0_5 = arith.constant 0 : index
    %c0_6 = arith.constant 0 : index
    %6 = vector.load %arg4[%c0_5, %c0_6] : memref<16x32xf32, #tpu.memory_space<vmem>>, vector<16x32xf32>
    tpu.vector_store %arg4[%c0_5, %c0_6], %5 {strides = array<i32>} : memref<16x32xf32, #tpu.memory_space<vmem>>, vector<16x32xf32>,
    return
  }
  func.func @transform_0(%arg0: i32) -> (i32, i32) {
    %c0_i32 = arith.constant 0 : i32
    %c0_i32_0 = arith.constant 0 : i32
    return %arg0, %c0_i32 : i32, i32
  }
  func.func @transform_1(%arg0: i32) -> (i32, i32) {
    %c0_i32 = arith.constant 0 : i32
    %c0_i32_0 = arith.constant 0 : i32
    %c0_i32_1 = arith.constant 0 : i32
    return %c0_i32, %c0_i32_0 : i32, i32
  }
  func.func @transform_2(%arg0: i32) -> (i32, i32) {
    %c0_i32 = arith.constant 0 : i32
    %c0_i32_0 = arith.constant 0 : i32
    %c0_i32_1 = arith.constant 0 : i32
    return %c0_i32, %c0_i32_0 : i32, i32
  }
  func.func @transform_3(%arg0: i32) -> (i32, i32) {
    %c0_i32 = arith.constant 0 : i32
    %c0_i32_0 = arith.constant 0 : i32
    return %arg0, %c0_i32 : i32, i32
  }
}

</mosaic_0001>

<llo_original>
// kernel: sequence_wise_linear.1
$region0: #{sequence_wise_linear.1}
  #allocation0 [shape = 'u32[]', space=smem, size = 0x4, offset = 0x4, fixed_abs, tag = 'smem constant byte address 0x4 - core index']
  #allocation1 [shape = 'u32[144,128]{1,0:T(1,128)}', space=vmem, size = 0x12000, scoped, tag = 'internal scratch']
  %s0 = inlined_call_operand.hbm [shape: f32[16,32], index: 0, kind: input, shape index: {}]
  %s1 = inlined_call_operand.hbm [shape: f32[32,32], index: 1, kind: input, shape index: {}]
  %s2 = inlined_call_operand.vmem [shape: f32[1,32], index: 2, kind: input, shape index: {}]
  %s3 = inlined_call_operand.hbm [shape: f32[16,32], index: 3, kind: output, shape index: {}]
  %s4 = sld [smem:[#allocation0]]
  $region30: #{sequence_wise_linear.1} parent=0
    _
  %s6 = ssub.s32 1, %s4
  %s7 = scalar_select 0, %s6, %s4
  $region1: #{sequence_wise_linear.1} parent=0
    #allocation2 [shape = 'u8[8192]{0}', space=vmem, size = 0x2000, scoped, tag = 'input window, operand 0, single buffered']
    #allocation3 [shape = 's32[1]{0}', space=sflag, size = 0x4, scoped, tag = 'scoped memory for sequence_wise_linear.1']
    #allocation4 [shape = 's32[1]{0}', space=sflag, size = 0x4, scoped, tag = 'scoped memory for sequence_wise_linear.1']
    #allocation5 [shape = 'u8[16384]{0}', space=vmem, size = 0x4000, scoped, tag = 'input window, operand 1, single buffered']
    #allocation6 [shape = 's32[1]{0}', space=sflag, size = 0x4, scoped, tag = 'scoped memory for sequence_wise_linear.1']
    #allocation7 [shape = 'u8[8192]{0}', space=vmem, size = 0x2000, scoped, tag = 'output window, operand 0, single buffered']
    %8 = vsyncpa [#allocation3], 0
    %9 = vsyncpa [#allocation6], 0
    %10 = vsyncpa [#allocation4], 0
    // Predicated region
    $region2: #{sequence_wise_linear.1} parent=1 // pred_check
      _
    $region3: #{sequence_wise_linear.1} parent=1 // pred_check_branch
      %12 = sbr.rel (0) target = $region5
    $region4: #{sequence_wise_linear.1} parent=1 // pred_region
      %s14 = ssub.s32 256, 256
      %15 = vsyncadd [#allocation3], %s14
      %s16 = sshll.u32 [#allocation2], 4
      %s17 = int_to_ptr.vmem [resolvable:$true] %s16
      %22 = dma.hbm_to_vmem [thread:$0]  %s0, 256, %s17, [#allocation3], 128, 128, 8
    $region5: #{sequence_wise_linear.1} parent=1 // pred_fallthru
      _
    // Predicated region
    $region6: #{sequence_wise_linear.1} parent=1 // pred_check
      _
    $region7: #{sequence_wise_linear.1} parent=1 // pred_check_branch
      %24 = sbr.rel (0) target = $region9
    $region8: #{sequence_wise_linear.1} parent=1 // pred_region
      %s26 = ssub.s32 512, 512
      %27 = vsyncadd [#allocation6], %s26
      %s28 = sshll.u32 [#allocation5], 4
      %s29 = int_to_ptr.vmem [resolvable:$true] %s28
      %34 = dma.hbm_to_vmem [thread:$0]  %s1, 512, %s29, [#allocation6], 128, 128, 8
    $region9: #{sequence_wise_linear.1} parent=1 // pred_fallthru
      _
    // Predicated region
    $region10: #{sequence_wise_linear.1} parent=1 // pred_check
      _
    $region11: #{sequence_wise_linear.1} parent=1 // pred_check_branch
      %36 = sbr.rel (0) target = $region13
    $region12: #{sequence_wise_linear.1} parent=1 // pred_region
      _
    $region13: #{sequence_wise_linear.1} parent=1 // pred_fallthru
      _
    // Predicated region
    $region14: #{sequence_wise_linear.1} parent=1 // pred_check
      _
    $region15: #{sequence_wise_linear.1} parent=1 // pred_check_branch
      %38 = sbr.rel (0) target = $region17
    $region16: #{sequence_wise_linear.1} parent=1 // pred_region
      %39 = dma.done [#allocation3], 256
    $region17: #{sequence_wise_linear.1} parent=1 // pred_fallthru
      _
    // Predicated region
    $region18: #{sequence_wise_linear.1} parent=1 // pred_check
      _
    $region19: #{sequence_wise_linear.1} parent=1 // pred_check_branch
      %41 = sbr.rel (0) target = $region21
    $region20: #{sequence_wise_linear.1} parent=1 // pred_region
      %42 = dma.done [#allocation6], 512
    $region21: #{sequence_wise_linear.1} parent=1 // pred_fallthru
      _
    %v43 = vld [vmem:[#allocation2] sm:$0xff]
    %v44 = vld [vmem:[#allocation2 + $0x8] sm:$0xff]
    %v45 = vld [vmem:[#allocation5] sm:$0xff]
    %v46 = vld [vmem:[#allocation5 + $0x8] sm:$0xff]
    %v47 = vld [vmem:[#allocation5 + $0x10] sm:$0xff]
    %v48 = vld [vmem:[#allocation5 + $0x18] sm:$0xff]
    %v49 = vld [vmem:[%s2] sm:$0x1]
    %v51 = vlaneseq
    %v52 = vshrl.u32 %v51, 7
    %v53 = vsub.s32 0, %v52
    %v54 = vrot.slane %v49, %v53
    %vm56 = vcmask 261120
    %v58 = vsel %vm56, %v43, 0
    %v61 = vsel %vm56, %v44, 0
    %63 = vmatprep.subr.mxu0 0.0
    %64 = vmatpush1.msra.mxu0 %v45
    %65 = vmatprep.subr.mxu0 0.0
    %66 = vmatpush1.msra.mxu0 %v46
    %67 = vmatprep.subr.mxu0 0.0
    %68 = vmatpush1.msra.mxu0 %v47
    %69 = vmatprep.subr.mxu0 0.0
    %70 = vmatpush1.msra.mxu0 %v48
    %71 = vmatprep.subr.mxu0 0.0
    %72 = vmatpush1.msra.mxu0 0.0
    %73 = vmatprep.subr.mxu0 0.0
    %74 = vmatpush1.msra.mxu0 0.0
    %75 = vmatprep.subr.mxu0 0.0
    %76 = vmatpush1.msra.mxu0 0.0
    %77 = vmatprep.subr.mxu0 0.0
    %78 = vmatpush1.msra.mxu0 0.0
    %79 = vmatprep.subr.mxu0 0.0
    %80 = vmatpush1.msra.mxu0 0.0
    %81 = vmatprep.subr.mxu0 0.0
    %82 = vmatpush1.msra.mxu0 0.0
    %83 = vmatprep.subr.mxu0 0.0
    %84 = vmatpush1.msra.mxu0 0.0
    %85 = vmatprep.subr.mxu0 0.0
    %86 = vmatpush1.msra.mxu0 0.0
    %87 = vmatprep.subr.mxu0 0.0
    %88 = vmatpush1.msra.mxu0 0.0
    %89 = vmatprep.subr.mxu0 0.0
    %90 = vmatpush1.msra.mxu0 0.0
    %91 = vmatprep.subr.mxu0 0.0
    %92 = vmatpush1.msra.mxu0 0.0
    %93 = vmatprep.subr.mxu0 0.0
    %94 = vmatpush1.msra.mxu0 0.0
    %95 = vmatprep.subr.mxu0 0.0
    %96 = vmatpush1.msra.mxu0 0.0
    %97 = vmatprep.subr.mxu0 0.0
    %98 = vmatpush1.msra.mxu0 0.0
    %99 = vmatprep.subr.mxu0 0.0
    %100 = vmatpush1.msra.mxu0 0.0
    %101 = vmatprep.subr.mxu0 0.0
    %102 = vmatpush1.msra.mxu0 0.0
    %103 = vmatprep.subr.mxu0 0.0
    %104 = vmatpush1.msra.mxu0 0.0
    %105 = vmatprep.subr.mxu0 0.0
    %106 = vmatpush1.msra.mxu0 0.0
    %107 = vmatprep.subr.mxu0 0.0
    %108 = vmatpush1.msra.mxu0 0.0
    %109 = vmatprep.subr.mxu0 0.0
    %110 = vmatpush1.msra.mxu0 0.0
    %111 = vmatprep.subr.mxu0 0.0
    %112 = vmatpush1.msra.mxu0 0.0
    %113 = vmatprep.subr.mxu0 0.0
    %114 = vmatpush1.msra.mxu0 0.0
    %115 = vmatprep.subr.mxu0 0.0
    %116 = vmatpush1.msra.mxu0 0.0
    %117 = vmatprep.subr.mxu0 0.0
    %118 = vmatpush1.msra.mxu0 0.0
    %119 = vmatprep.subr.mxu0 0.0
    %120 = vmatpush1.msra.mxu0 0.0
    %121 = vmatprep.subr.mxu0 0.0
    %122 = vmatpush1.msra.mxu0 0.0
    %123 = vmatprep.subr.mxu0 0.0
    %124 = vmatpush1.msra.mxu0 0.0
    %125 = vmatprep.subr.mxu0 0.0
    %126 = vmatpush1.msra.mxu0 0.0
    %127 = vmatprep.mubr.f32.mxu0 0.0
    %128 = vmatmul.mubr.f32.gmra.mrb[0].mxu0 %v58
    %v129 = vpop.f32.mrb[0].mxu0
    %v130 = vadd.f32 %v54, %v129
    %v131 = vpop.f32.mrb[0].mxu0
    %132 = vmatprep.mubr.f32.mxu0 0.0
    %133 = vmatmul.mubr.f32.gmra.mrb[0].mxu0 %v61
    %v134 = vpop.f32.mrb[0].mxu0
    %v135 = vadd.f32 %v54, %v134
    %v136 = vpop.f32.mrb[0].mxu0
    %137 = vdwg.mxu0
    %138 = vst.msk [vmem:[#allocation7] sm:$0xff] %vm56, %v130
    %139 = vst.msk [vmem:[#allocation7 + $0x8] sm:$0xff] %vm56, %v135
    // Predicated region
    $region22: #{sequence_wise_linear.1} parent=1 // pred_check
      _
    $region23: #{sequence_wise_linear.1} parent=1 // pred_check_branch
      %141 = sbr.rel (0) target = $region25
    $region24: #{sequence_wise_linear.1} parent=1 // pred_region
      %s143 = ssub.s32 256, 256
      %144 = vsyncadd [#allocation4], %s143
      %s145 = sshll.u32 [#allocation7], 4
      %s146 = int_to_ptr.vmem [resolvable:$true] %s145
      %151 = dma.vmem_to_hbm [thread:$0]  %s146, 256, %s3, [#allocation4], 128, 128, 8
    $region25: #{sequence_wise_linear.1} parent=1 // pred_fallthru
      _
    // Predicated region
    $region26: #{sequence_wise_linear.1} parent=1 // pred_check
      _
    $region27: #{sequence_wise_linear.1} parent=1 // pred_check_branch
      %153 = sbr.rel (0) target = $region29
    $region28: #{sequence_wise_linear.1} parent=1 // pred_region
      %154 = dma.done [#allocation4], 256
    $region29: #{sequence_wise_linear.1} parent=1 // pred_fallthru
      _
    %155 = vsyncpa [#allocation3], 1
    %156 = vsyncpa [#allocation6], 1
    %157 = vsyncpa [#allocation4], 1

</llo_original>
